<compile_context>
chip_gen: v7x
topology: tpu7x:2x2x1
jax: 0.10.0
libtpu: 0.0.40
codegen_flags: <defaults>
</compile_context>

<pallas_src>
from typing import NamedTuple

import jax
import jax.numpy as jnp
from jax.experimental import pallas as pl
from jax.experimental.pallas import tpu as pltpu


def _round_up(x, m):
    return (x + m - 1) // m * m


def _vmem_budget_bytes():
    """Per-generation scoped-VMEM budget (3/4 of physical capacity, capped)."""
    cap = 64 << 20
    try:
        info = pltpu.get_tpu_info()
        cap = int(getattr(info, "vmem_capacity_bytes", cap)) or cap
    except Exception:
        pass
    cap = min(cap, 128 << 20)
    return (cap * 3) // 4


# ----------------------------------------------------------------------------
# Kernel: one (tm x tn) output tile = relu(x_tile) @ w_tile, f32 accumulation.
# ----------------------------------------------------------------------------
def _calibrator_kernel(x_ref, w_ref, o_ref):
    # x_ref: (tm, H) activation tile (streamed along the inner row axis)
    # w_ref: (H, tn) pre-transposed weight tile, resident across the inner axis
    # o_ref: (tm, tn) output tile (lane-dense stores)
    x = jnp.maximum(x_ref[...], 0.0)          # inline ReLU, co-issues on the VPU
    o_ref[...] = jnp.dot(
        x, w_ref[...], preferred_element_type=jnp.float32
    ).astype(o_ref.dtype)


# ----------------------------------------------------------------------------
# One-time weight preparation (cache the result across forward calls).
# ----------------------------------------------------------------------------
class PreparedWeight(NamedTuple):
    wt: jax.Array          # [H, Vp] compute-dtype, pre-transposed + vocab-padded
    vocab_size: int        # V (unpadded)
    hidden_size: int       # H
    tn: int                # vocab tile (multiple of 256)
    compute_dtype: jnp.dtype


def prepare_calibrator_weight(weight, *, compute_dtype=jnp.bfloat16):
    """weight: [V, H] (PyTorch nn.Linear layout). Cast + transpose + pad once."""
    V, H = weight.shape
    cbytes = jnp.dtype(compute_dtype).itemsize
    budget = _vmem_budget_bytes()

    # Vocab (lane) tile: multiples of 256 fill the 256-wide MXU; allow 1024 only
    # on big-VMEM parts (v5e/v6e).  Shrink if the weight buffers would not leave
    # room for activation/output tiles.
    tn_max = 1024 if budget >= (80 << 20) else 512
    tn = min(tn_max, _round_up(V, 256))
    ref_tm = 256
    while tn > 256 and (2 * H * tn * cbytes + 2 * ref_tm * H * cbytes
                        + 2 * ref_tm * tn * 4) > budget:
        tn = max(256, _round_up(tn // 2, 256))

    wt = weight.astype(compute_dtype).T          # [H, V], vocab on the lane axis
    Vp = _round_up(V, tn)
    if Vp != V:
        wt = jnp.pad(wt, ((0, 0), (0, Vp - V)))
    return PreparedWeight(wt=wt, vocab_size=V, hidden_size=H, tn=tn,
                          compute_dtype=jnp.dtype(compute_dtype))


# ----------------------------------------------------------------------------
# Forward pass.
# ----------------------------------------------------------------------------
def calibrator_forward(hidden_states, prepared: PreparedWeight, *, out_dtype=None):
    """Calibrator.forward: Linear(relu(x)), no bias.

    hidden_states: [..., H].  Returns logits [..., V] (out_dtype defaults to the
    input dtype; pass jnp.bfloat16 to halve output HBM traffic for large M*V).
    """
    orig_shape = hidden_states.shape
    H = orig_shape[-1]
    assert H == prepared.hidden_size, "hidden size mismatch with prepared weight"
    if out_dtype is None:
        out_dtype = hidden_states.dtype

    compute_dtype = prepared.compute_dtype
    cbytes = jnp.dtype(compute_dtype).itemsize
    obytes = jnp.dtype(out_dtype).itemsize
    tn = prepared.tn
    V = prepared.vocab_size
    Vp = prepared.wt.shape[1]
    budget = _vmem_budget_bytes()

    x2d = hidden_states.reshape(-1, H).astype(compute_dtype)
    M = x2d.shape[0]

    # Row tile: multiple of 16 (bf16 packs 2 rows/sublane); shrink if needed to
    # fit the double-buffered x / weight / output tiles in the VMEM budget.
    tm = min(256, _round_up(M, 16))
    while tm > 16 and (2 * tm * H * cbytes + 2 * H * tn * cbytes
                       + 2 * tm * tn * obytes) > budget:
        tm = max(16, _round_up(tm // 2, 16))

    Mp = _round_up(M, tm)
    if Mp != M:
        x2d = jnp.pad(x2d, ((0, Mp - M), (0, 0)))

    gv = Vp // tn
    gm = Mp // tm
    grid = (gv, gm)   # vocab OUTER, rows INNER -> weight tile resident across i

    cost = pl.CostEstimate(
        flops=2 * Mp * Vp * H,
        transcendentals=0,
        bytes_accessed=int(
            H * Vp * cbytes              # weight streamed exactly once
            + gv * Mp * H * cbytes       # activation re-fetched once per vocab tile
            + Mp * Vp * obytes           # output stores
        ),
    )

    out = pl.pallas_call(
        _calibrator_kernel,
        out_shape=jax.ShapeDtypeStruct((Mp, Vp), out_dtype),
        grid_spec=pltpu.PrefetchScalarGridSpec(
            num_scalar_prefetch=0,
            grid=grid,
            in_specs=[
                # activation tile streams along the inner row axis
                pl.BlockSpec((tm, H), lambda j, i: (i, 0)),
                # weight tile: block index constant along the inner axis ->
                # resident in VMEM; full weight is DMA'd from HBM exactly once
                pl.BlockSpec((H, tn), lambda j, i: (0, j)),
            ],
            out_specs=pl.BlockSpec((tm, tn), lambda j, i: (i, j)),
        ),
        compiler_params=pltpu.CompilerParams(
            # No cross-step state -> both axes parallel (v7x 2-TC sharding even
            # for small-M calibration batches).
            dimension_semantics=("parallel", "parallel"),
            vmem_limit_bytes=int(budget),
        ),
        cost_estimate=cost,
    )(x2d, prepared.wt)

    out = out[:M, :V]
    return out.reshape(*orig_shape[:-1], V)


def calibrator_forward_uncached(hidden_states, weight, *,
                                compute_dtype=jnp.bfloat16, out_dtype=None):
    """Convenience path; prefer caching prepare_calibrator_weight() externally."""
    prepared = prepare_calibrator_weight(weight, compute_dtype=compute_dtype)
    return calibrator_forward(hidden_states, prepared, out_dtype=out_dtype)


if __name__ == "__main__":
    # Small shapes consistent with the module: batch=2, seq=8, hidden=32, vocab=256
    batch, seq, hidden, vocab = 2, 8, 32, 256

    key = jax.random.PRNGKey(0)
    kx, kw = jax.random.split(key)
    hidden_states = jax.random.normal(kx, (batch, seq, hidden), dtype=jnp.float32)
    # Deterministic weight mimicking nn.Linear's uniform(-1/sqrt(H), 1/sqrt(H))
    bound = 1.0 / (hidden ** 0.5)
    weight = jax.random.uniform(
        kw, (vocab, hidden), dtype=jnp.float32, minval=-bound, maxval=bound
    )

    # Weight prep is done once and reused across calls (the cached path).
    prepared = prepare_calibrator_weight(weight)

    out = calibrator_forward(hidden_states, prepared)
    out = jax.block_until_ready(out)
    assert out.shape == (batch, seq, vocab)
    assert out.dtype == hidden_states.dtype

    # Pure-JAX reference with the same bf16 operand cast + f32 accumulation.
    x_bf = jnp.maximum(hidden_states.astype(jnp.bfloat16), 0.0).reshape(-1, hidden)
    w_bf = weight.astype(jnp.bfloat16)
    ref = jnp.dot(x_bf, w_bf.T, preferred_element_type=jnp.float32)
    ref = ref.astype(jnp.float32).reshape(batch, seq, vocab)
    assert jnp.allclose(out, ref, atol=1e-2, rtol=1e-2)

    print("KERNEL_OK")
</pallas_src>

<mosaic_0001>
module attributes {stable_mosaic.version = 11 : i64} {
  func.func @_calibrator_kernel(%arg0: i32, %arg1: i32, %arg2: memref<16x32xbf16, #tpu.memory_space<vmem>>, %arg3: memref<32x256xbf16, #tpu.memory_space<vmem>>, %arg4: memref<16x256xf32, #tpu.memory_space<vmem>>) attributes {dimension_semantics = [#tpu.dimension_semantics<parallel>, #tpu.dimension_semantics<parallel>], iteration_bounds = array<i64: 1, 1>, scalar_prefetch = 0 : i64, scratch_operands = 0 : i64, tpu.core_type = #tpu.core_type<tc>, window_params = [{transform_indices = @transform_0, window_bounds = array<i64: 16, 32>}, {transform_indices = @transform_1, window_bounds = array<i64: 32, 256>}, {transform_indices = @transform_2, window_bounds = array<i64: 16, 256>}]} {
    %c0 = arith.constant 0 : index
    %c0_0 = arith.constant 0 : index
    %0 = vector.load %arg2[%c0, %c0_0] : memref<16x32xbf16, #tpu.memory_space<vmem>>, vector<16x32xbf16>
    %cst = arith.constant 0.000000e+00 : bf16
    %1 = vector.broadcast %cst : bf16 to vector<16x32xbf16>
    %2 = arith.maximumf %0, %1 : vector<16x32xbf16>
    %c0_1 = arith.constant 0 : index
    %c0_2 = arith.constant 0 : index
    %3 = vector.load %arg3[%c0_1, %c0_2] : memref<32x256xbf16, #tpu.memory_space<vmem>>, vector<32x256xbf16>
    %cst_3 = arith.constant dense<0.000000e+00> : vector<16x256xf32>
    %4 = tpu.matmul %2, %3, %cst_3 {dimension_numbers = #tpu.dot_dimension_numbers<[1], [0], [0], [1], [0, 0, 1, 1], [], []>} : vector<16x32xbf16>, vector<32x256xbf16>, vector<16x256xf32> -> vector<16x256xf32>
    %c0_4 = arith.constant 0 : index
    %c0_5 = arith.constant 0 : index
    %5 = vector.load %arg4[%c0_4, %c0_5] : memref<16x256xf32, #tpu.memory_space<vmem>>, vector<16x256xf32>
    tpu.vector_store %arg4[%c0_4, %c0_5], %4 {strides = array<i32>} : memref<16x256xf32, #tpu.memory_space<vmem>>, vector<16x256xf32>,
    return
  }
  func.func @transform_0(%arg0: i32, %arg1: i32) -> (i32, i32) {
    %c0_i32 = arith.constant 0 : i32
    %c0_i32_0 = arith.constant 0 : i32
    return %arg1, %c0_i32 : i32, i32
  }
  func.func @transform_1(%arg0: i32, %arg1: i32) -> (i32, i32) {
    %c0_i32 = arith.constant 0 : i32
    %c0_i32_0 = arith.constant 0 : i32
    return %c0_i32, %arg0 : i32, i32
  }
  func.func @transform_2(%arg0: i32, %arg1: i32) -> (i32, i32) {
    %c0_i32 = arith.constant 0 : i32
    return %arg1, %arg0 : i32, i32
  }
}

</mosaic_0001>

<llo_original>
// kernel: tpu_custom_call.1
$region0: #{tpu_custom_call.1}
  #allocation0 [shape = 'u32[]', space=smem, size = 0x4, offset = 0x4, fixed_abs, tag = 'smem constant byte address 0x4 - core index']
  #allocation1 [shape = 'u32[144,128]{1,0:T(1,128)}', space=vmem, size = 0x12000, scoped, tag = 'internal scratch']
  %s0 = inlined_call_operand.hbm [shape: bf16[16,32], index: 0, kind: input, shape index: {}]
  %s1 = inlined_call_operand.hbm [shape: bf16[32,256], index: 1, kind: input, shape index: {}]
  %s2 = inlined_call_operand.hbm [shape: f32[16,256], index: 2, kind: output, shape index: {}]
  %s3 = sld [smem:[#allocation0]]
  $region26: #{tpu_custom_call.1} parent=0
    _
  %s5 = ssub.s32 1, %s3
  %s6 = scalar_select 0, %s5, %s3
  $region1: #{tpu_custom_call.1} parent=0
    #allocation2 [shape = 'u8[4096]{0}', space=vmem, size = 0x1000, scoped, tag = 'input window, operand 0, single buffered']
    #allocation3 [shape = 's32[1]{0}', space=sflag, size = 0x4, scoped, tag = 'scoped memory for tpu_custom_call.1']
    #allocation4 [shape = 's32[1]{0}', space=sflag, size = 0x4, scoped, tag = 'scoped memory for tpu_custom_call.1']
    #allocation5 [shape = 'u8[16384]{0}', space=vmem, size = 0x4000, scoped, tag = 'input window, operand 1, single buffered']
    #allocation6 [shape = 's32[1]{0}', space=sflag, size = 0x4, scoped, tag = 'scoped memory for tpu_custom_call.1']
    #allocation7 [shape = 'u8[16384]{0}', space=vmem, size = 0x4000, scoped, tag = 'output window, operand 0, single buffered']
    %7 = vsyncpa [#allocation3], 0
    %8 = vsyncpa [#allocation6], 0
    %9 = vsyncpa [#allocation4], 0
    // Predicated region
    $region2: #{tpu_custom_call.1} parent=1 // pred_check
      _
    $region3: #{tpu_custom_call.1} parent=1 // pred_check_branch
      %11 = sbr.rel (0) target = $region5
    $region4: #{tpu_custom_call.1} parent=1 // pred_region
      %s13 = ssub.s32 128, 128
      %14 = vsyncadd [#allocation3], %s13
      %s15 = sshll.u32 [#allocation2], 4
      %s16 = int_to_ptr.vmem [resolvable:$true] %s15
      %21 = dma.hbm_to_vmem [thread:$0]  %s0, 128, %s16, [#allocation3], 64, 64, 4
    $region5: #{tpu_custom_call.1} parent=1 // pred_fallthru
      _
    // Predicated region
    $region6: #{tpu_custom_call.1} parent=1 // pred_check
      _
    $region7: #{tpu_custom_call.1} parent=1 // pred_check_branch
      %23 = sbr.rel (0) target = $region9
    $region8: #{tpu_custom_call.1} parent=1 // pred_region
      %s25 = ssub.s32 512, 512
      %26 = vsyncadd [#allocation6], %s25
      %s27 = sshll.u32 [#allocation5], 4
      %s28 = int_to_ptr.vmem [resolvable:$true] %s27
      %33 = dma.hbm_to_vmem [thread:$0]  %s1, 512, %s28, [#allocation6], 128, 128, 8
    $region9: #{tpu_custom_call.1} parent=1 // pred_fallthru
      _
    // Predicated region
    $region10: #{tpu_custom_call.1} parent=1 // pred_check
      _
    $region11: #{tpu_custom_call.1} parent=1 // pred_check_branch
      %35 = sbr.rel (0) target = $region13
    $region12: #{tpu_custom_call.1} parent=1 // pred_region
      %36 = dma.done [#allocation3], 128
    $region13: #{tpu_custom_call.1} parent=1 // pred_fallthru
      _
    // Predicated region
    $region14: #{tpu_custom_call.1} parent=1 // pred_check
      _
    $region15: #{tpu_custom_call.1} parent=1 // pred_check_branch
      %38 = sbr.rel (0) target = $region17
    $region16: #{tpu_custom_call.1} parent=1 // pred_region
      %39 = dma.done [#allocation6], 512
    $region17: #{tpu_custom_call.1} parent=1 // pred_fallthru
      _
    %v41 = vld [vmem:[#allocation2] sm:$0xf]
    %v42 = vld [vmem:[#allocation2 + $0x4] sm:$0xf]
    %v43 = vmax.bf16 %v41, 0
    %v44 = vmax.bf16 %v42, 0
    %v45 = vld [vmem:[#allocation5] sm:$0xff]
    %v46 = vld [vmem:[#allocation5 + $0x8] sm:$0xff]
    %v47 = vld [vmem:[#allocation5 + $0x10] sm:$0xff]
    %v48 = vld [vmem:[#allocation5 + $0x18] sm:$0xff]
    %v51 = vunpack.c.l.b16 %v43
    %v52 = vunpack.c.l.b16 %v44
    %v53 = vpack.c.b16 %v52, %v51
    %v58 = vunpack.c.l.b16 %v45
    %v59 = vunpack.c.h.b16 %v45
    %v60 = vunpack.c.l.b16 %v46
    %v61 = vunpack.c.h.b16 %v46
    %v62 = vunpack.c.l.b16 %v47
    %v63 = vunpack.c.h.b16 %v47
    %v64 = vunpack.c.l.b16 %v48
    %v65 = vunpack.c.h.b16 %v48
    %v66 = vpack.c.b16 %v60, %v58
    %v67 = vpack.c.b16 %v61, %v59
    %v68 = vpack.c.b16 %v64, %v62
    %v69 = vpack.c.b16 %v65, %v63
    %vm74 = vcmask 261120
    %v76 = vsel %vm74, %v53, 0
    %78 = vmatprep.subr.bf16.mxu0 %v67
    %79 = vmatpush1.bf16.msra.mxu0 %v66
    %80 = vmatprep.subr.bf16.mxu0 %v69
    %81 = vmatpush1.bf16.msra.mxu0 %v68
    %82 = vmatprep.subr.bf16.mxu0 0
    %83 = vmatpush1.bf16.msra.mxu0 0
    %84 = vmatprep.subr.bf16.mxu0 0
    %85 = vmatpush1.bf16.msra.mxu0 0
    %86 = vmatprep.subr.bf16.mxu0 0
    %87 = vmatpush1.bf16.msra.mxu0 0
    %88 = vmatprep.subr.bf16.mxu0 0
    %89 = vmatpush1.bf16.msra.mxu0 0
    %90 = vmatprep.subr.bf16.mxu0 0
    %91 = vmatpush1.bf16.msra.mxu0 0
    %92 = vmatprep.subr.bf16.mxu0 0
    %93 = vmatpush1.bf16.msra.mxu0 0
    %94 = vmatprep.subr.bf16.mxu0 0
    %95 = vmatpush1.bf16.msra.mxu0 0
    %96 = vmatprep.subr.bf16.mxu0 0
    %97 = vmatpush1.bf16.msra.mxu0 0
    %98 = vmatprep.subr.bf16.mxu0 0
    %99 = vmatpush1.bf16.msra.mxu0 0
    %100 = vmatprep.subr.bf16.mxu0 0
    %101 = vmatpush1.bf16.msra.mxu0 0
    %102 = vmatprep.subr.bf16.mxu0 0
    %103 = vmatpush1.bf16.msra.mxu0 0
    %104 = vmatprep.subr.bf16.mxu0 0
    %105 = vmatpush1.bf16.msra.mxu0 0
    %106 = vmatprep.subr.bf16.mxu0 0
    %107 = vmatpush1.bf16.msra.mxu0 0
    %108 = vmatprep.subr.bf16.mxu0 0
    %109 = vmatpush1.bf16.msra.mxu0 0
    %110 = vmatprep.mubr.bf16.mxu0 0
    %111 = vmatmul.mubr.bf16.gmra.mrb[0].mxu0 %v76
    %v112 = vpop.f32.mrb[0].mxu0
    %v113 = vadd.f32 0.0, %v112
    %v114 = vpop.f32.mrb[0].mxu0
    %v115 = vadd.f32 0.0, %v114
    %v116 = vpop.f32.mrb[0].mxu0
    %v117 = vadd.f32 0.0, %v116
    %v118 = vpop.f32.mrb[0].mxu0
    %v119 = vadd.f32 0.0, %v118
    %120 = vdwg.mxu0
    %121 = vst [vmem:[#allocation7] sm:$0xff] %v113
    %122 = vst [vmem:[#allocation7 + $0x8] sm:$0xff] %v115
    %123 = vst [vmem:[#allocation7 + $0x10] sm:$0xff] %v117
    %124 = vst [vmem:[#allocation7 + $0x18] sm:$0xff] %v119
    // Predicated region
    $region18: #{tpu_custom_call.1} parent=1 // pred_check
      _
    $region19: #{tpu_custom_call.1} parent=1 // pred_check_branch
      %126 = sbr.rel (0) target = $region21
    $region20: #{tpu_custom_call.1} parent=1 // pred_region
      %s128 = ssub.s32 512, 512
      %129 = vsyncadd [#allocation4], %s128
      %s130 = sshll.u32 [#allocation7], 4
      %s131 = int_to_ptr.vmem [resolvable:$true] %s130
      %136 = dma.vmem_to_hbm [thread:$0]  %s131, 512, %s2, [#allocation4], 256, 256, 16
    $region21: #{tpu_custom_call.1} parent=1 // pred_fallthru
      _
    // Predicated region
    $region22: #{tpu_custom_call.1} parent=1 // pred_check
      _
    $region23: #{tpu_custom_call.1} parent=1 // pred_check_branch
      %138 = sbr.rel (0) target = $region25
    $region24: #{tpu_custom_call.1} parent=1 // pred_region
      %139 = dma.done [#allocation4], 512
    $region25: #{tpu_custom_call.1} parent=1 // pred_fallthru
      _
    %140 = vsyncpa [#allocation3], 1
    %141 = vsyncpa [#allocation6], 1
    %142 = vsyncpa [#allocation4], 1

</llo_original>
